<compile_context>
chip_gen: v7x
topology: tpu7x:2x2x1
jax: 0.10.0
libtpu: 0.0.40
codegen_flags: <defaults>
</compile_context>

<pallas_src>
import math

import jax
import jax.numpy as jnp
from jax.experimental import pallas as pl
from jax.experimental.pallas import tpu as pltpu


def build_pe_table(d_model: int, max_len: int = 5000) -> jnp.ndarray:
    """Deterministic sinusoidal table, shape (max_len, d_model), float32."""
    pos = jnp.arange(max_len, dtype=jnp.float32)[:, None]                 # (L, 1)
    div = jnp.exp(
        jnp.arange(0, d_model, 2, dtype=jnp.float32)
        * (-math.log(10000.0) / d_model)
    )                                                                     # (D/2,)
    ang = pos * div                                                       # (L, D/2)
    # interleave sin (even cols) / cos (odd cols) exactly like pe[:,0::2]/pe[:,1::2]
    pe = jnp.stack([jnp.sin(ang), jnp.cos(ang)], axis=-1).reshape(max_len, d_model)
    return pe


# Below this element count the pallas_call fixed cost exceeds a fused XLA add.
_PALLAS_MIN_ELEMS = 128 * 1024


def _choose_block_rows(n_rows: int, row_bytes: int,
                       target_block_bytes: int = 4 * 1024 * 1024) -> int:
    """Row tile (multiple of 8), ~4 MiB per x block, preferring an even step count."""
    br = max(8, (target_block_bytes // max(row_bytes, 1)) // 8 * 8)
    full = -(-n_rows // 8) * 8
    br = min(br, full)
    steps = -(-n_rows // br)
    if n_rows > 8 and steps % 2 == 1:
        # Prefer an even number of grid steps so the v7x 2-TC "parallel" split
        # does not leave one core idle for the last block.
        tgt = steps + 1 if steps > 1 else 2
        cand = -(-(-(-n_rows // tgt)) // 8) * 8       # round_up(ceil(n/tgt), 8)
        if cand >= 8 and -(-n_rows // cand) == tgt:
            br = cand
    return max(8, br)


def _make_kernel(batch: int):
    def kernel(x_ref, pe_ref, o_ref):
        # Replicate the thin (br, D) pe tile over batch along lanes; this
        # XLU/VPU work hides completely under the HBM DMA.
        pe_t = jnp.tile(pe_ref[...], (1, batch))      # (br, B*D)
        o_ref[...] = (x_ref[...] + pe_t).astype(o_ref.dtype)
    return kernel


def _dropout(y: jnp.ndarray, p: float, key) -> jnp.ndarray:
    if p <= 0.0:
        return y
    if p >= 1.0:
        return jnp.zeros_like(y)
    keep = jax.random.bernoulli(key, 1.0 - p, y.shape)
    # Multiply in f32 to avoid bf16 rounding bias on the 1/(1-p) scale.
    return jnp.where(keep, y.astype(jnp.float32) * (1.0 / (1.0 - p)), 0.0).astype(y.dtype)


def positional_encoding_forward(
    x: jnp.ndarray,
    pe: jnp.ndarray,
    dropout_p: float = 0.1,
    training: bool = False,
    key=None,
    block_rows: int | None = None,
    force_pallas: bool = False,
) -> jnp.ndarray:
    """x: (S, B, D); pe: (max_len, D) float32; returns (S, B, D) in x.dtype."""
    S, B, D = x.shape
    assert pe.shape[0] >= S and pe.shape[1] == D

    pe_s = pe[:S].astype(x.dtype)                     # thin (S, D) stream

    # Tiny inputs: a fused XLA add is strictly faster than a pallas_call launch.
    if not force_pallas and x.size < _PALLAS_MIN_ELEMS:
        y = x + pe_s[:, None, :]
    else:
        W = B * D
        # Lane-dense 2D slab; reshaping a contiguous array is free (no copy).
        x2 = x.reshape(S, W)

        itemsize = jnp.dtype(x.dtype).itemsize
        br = block_rows if block_rows is not None else _choose_block_rows(S, W * itemsize)

        # Footprint-derived VMEM budget: (x in + out) double-buffered + pe + margin.
        blk_x = br * W * itemsize
        blk_pe = br * D * itemsize
        vmem_bytes = int(min(max(2 * (2 * blk_x + blk_pe) + (4 << 20), 16 << 20), 100 << 20))

        # TODO(synk): for very large B*D add a second grid axis tiling W (bw % 128 == 0)
        # so the minimum 8-row block still fits v7x's 64 MiB VMEM.
        out2 = pl.pallas_call(
            _make_kernel(B),
            out_shape=jax.ShapeDtypeStruct((S, W), x.dtype),
            grid_spec=pltpu.PrefetchScalarGridSpec(
                num_scalar_prefetch=0,
                grid=(pl.cdiv(S, br),),               # ragged tail masked by Pallas
                in_specs=[
                    pl.BlockSpec((br, W), lambda i: (i, 0)),   # x slab tile (full width)
                    pl.BlockSpec((br, D), lambda i: (i, 0)),   # thin pe tile
                ],
                out_specs=pl.BlockSpec((br, W), lambda i: (i, 0)),
            ),
            compiler_params=pltpu.CompilerParams(
                dimension_semantics=("parallel",),
                vmem_limit_bytes=vmem_bytes,
            ),
        )(x2, pe_s)
        y = out2.reshape(S, B, D)

    if training and dropout_p > 0.0:
        if key is None:
            key = jax.random.PRNGKey(0)
        y = _dropout(y, float(dropout_p), key)
    return y


if __name__ == "__main__":
    max_len = 5000
    key = jax.random.PRNGKey(0)
    kx, kx2, kdrop = jax.random.split(key, 3)

    # --- (a)/(b) Module-default small shape: seq=8, batch=2, d_model=32 ---
    S, B, D = 8, 2, 32
    x = jax.random.normal(kx, (S, B, D), dtype=jnp.float32)
    pe = build_pe_table(D, max_len)
    ref = x + pe[:S][:, None, :]

    # (a) auto dispatch: tiny input takes the fused-XLA path
    out_auto = jax.block_until_ready(positional_encoding_forward(x, pe, training=False))
    assert out_auto.shape == (S, B, D)
    assert jnp.allclose(out_auto, ref, atol=1e-6, rtol=1e-6)

    # (b) force the Pallas kernel at the same small shape (single (8, 64) block)
    out_k = jax.block_until_ready(
        positional_encoding_forward(x, pe, training=False, force_pallas=True))
    assert out_k.shape == (S, B, D)
    assert jnp.allclose(out_k, ref, atol=1e-6, rtol=1e-6)

    # --- (c) Lane-dense multi-tile shape: W = B*D = 128 lanes, 2 grid steps ---
    S2, B2, D2 = 128, 2, 64
    x_big = jax.random.normal(kx2, (S2, B2, D2), dtype=jnp.float32)
    pe_big = build_pe_table(D2, max_len)
    ref_big = x_big + pe_big[:S2][:, None, :]
    out_big = jax.block_until_ready(
        positional_encoding_forward(x_big, pe_big, training=False, force_pallas=True))
    assert jnp.allclose(out_big, ref_big, atol=1e-6, rtol=1e-6)

    # --- (d) Ragged tail: S not a multiple of the row tile (no jnp.pad used) ---
    S3 = 100
    out_rag = jax.block_until_ready(
        positional_encoding_forward(x_big[:S3], pe_big, training=False, force_pallas=True))
    assert jnp.allclose(out_rag, ref_big[:S3], atol=1e-6, rtol=1e-6)

    # --- (e) Training-mode dropout (wrapper-side jax.random; statistical check) ---
    p = 0.1
    out_tr = jax.block_until_ready(
        positional_encoding_forward(x_big, pe_big, dropout_p=p, training=True,
                                    key=kdrop, force_pallas=True))
    dropped = out_tr == 0.0
    frac = float(jnp.mean(dropped.astype(jnp.float32)))
    assert 0.02 < frac < 0.25, f"drop fraction {frac} not near p={p}"
    kept_ref = ref_big * (1.0 / (1.0 - p))
    assert jnp.allclose(jnp.where(dropped, kept_ref, out_tr), kept_ref, atol=1e-5, rtol=1e-5)

    print("KERNEL_OK")
</pallas_src>

<mosaic_0001>
module attributes {stable_mosaic.version = 11 : i64} {
  func.func @kernel(%arg0: i32, %arg1: memref<8x64xf32, #tpu.memory_space<vmem>>, %arg2: memref<8x32xf32, #tpu.memory_space<vmem>>, %arg3: memref<8x64xf32, #tpu.memory_space<vmem>>) attributes {dimension_semantics = [#tpu.dimension_semantics<parallel>], iteration_bounds = array<i64: 1>, scalar_prefetch = 0 : i64, scratch_operands = 0 : i64, tpu.core_type = #tpu.core_type<tc>, window_params = [{transform_indices = @transform_0, window_bounds = array<i64: 8, 64>}, {transform_indices = @transform_1, window_bounds = array<i64: 8, 32>}, {transform_indices = @transform_2, window_bounds = array<i64: 8, 64>}]} {
    %c0 = arith.constant 0 : index
    %c0_0 = arith.constant 0 : index
    %0 = vector.load %arg2[%c0, %c0_0] : memref<8x32xf32, #tpu.memory_space<vmem>>, vector<8x32xf32>
    %1 = tpu.concatenate %0, %0 in 1 : vector<8x32xf32>, vector<8x32xf32> -> vector<8x64xf32>
    %c0_1 = arith.constant 0 : index
    %c0_2 = arith.constant 0 : index
    %2 = vector.load %arg1[%c0_1, %c0_2] : memref<8x64xf32, #tpu.memory_space<vmem>>, vector<8x64xf32>
    %3 = arith.addf %2, %1 : vector<8x64xf32>
    %c0_3 = arith.constant 0 : index
    %c0_4 = arith.constant 0 : index
    %4 = vector.load %arg3[%c0_3, %c0_4] : memref<8x64xf32, #tpu.memory_space<vmem>>, vector<8x64xf32>
    tpu.vector_store %arg3[%c0_3, %c0_4], %3 {strides = array<i32>} : memref<8x64xf32, #tpu.memory_space<vmem>>, vector<8x64xf32>,
    return
  }
  func.func @transform_0(%arg0: i32) -> (i32, i32) {
    %c0_i32 = arith.constant 0 : i32
    %c0_i32_0 = arith.constant 0 : i32
    return %arg0, %c0_i32 : i32, i32
  }
  func.func @transform_1(%arg0: i32) -> (i32, i32) {
    %c0_i32 = arith.constant 0 : i32
    %c0_i32_0 = arith.constant 0 : i32
    return %arg0, %c0_i32 : i32, i32
  }
  func.func @transform_2(%arg0: i32) -> (i32, i32) {
    %c0_i32 = arith.constant 0 : i32
    %c0_i32_0 = arith.constant 0 : i32
    return %arg0, %c0_i32 : i32, i32
  }
}

</mosaic_0001>

<llo_original>
// kernel: tpu_custom_call.1
$region0: #{tpu_custom_call.1}
  #allocation0 [shape = 'u32[]', space=smem, size = 0x4, offset = 0x4, fixed_abs, tag = 'smem constant byte address 0x4 - core index']
  #allocation1 [shape = 'u32[144,128]{1,0:T(1,128)}', space=vmem, size = 0x12000, scoped, tag = 'internal scratch']
  %s0 = inlined_call_operand.hbm [shape: f32[8,64], index: 0, kind: input, shape index: {}]
  %s1 = inlined_call_operand.hbm [shape: f32[8,32], index: 1, kind: input, shape index: {}]
  %s2 = inlined_call_operand.hbm [shape: f32[8,64], index: 2, kind: output, shape index: {}]
  %s3 = sld [smem:[#allocation0]]
  $region26: #{tpu_custom_call.1} parent=0
    _
  %s5 = ssub.s32 1, %s3
  %s6 = scalar_select 0, %s5, %s3
  $region1: #{tpu_custom_call.1} parent=0
    #allocation2 [shape = 'u8[4096]{0}', space=vmem, size = 0x1000, scoped, tag = 'input window, operand 0, single buffered']
    #allocation3 [shape = 's32[1]{0}', space=sflag, size = 0x4, scoped, tag = 'scoped memory for tpu_custom_call.1']
    #allocation4 [shape = 's32[1]{0}', space=sflag, size = 0x4, scoped, tag = 'scoped memory for tpu_custom_call.1']
    #allocation5 [shape = 'u8[4096]{0}', space=vmem, size = 0x1000, scoped, tag = 'input window, operand 1, single buffered']
    #allocation6 [shape = 's32[1]{0}', space=sflag, size = 0x4, scoped, tag = 'scoped memory for tpu_custom_call.1']
    #allocation7 [shape = 'u8[4096]{0}', space=vmem, size = 0x1000, scoped, tag = 'output window, operand 0, single buffered']
    %7 = vsyncpa [#allocation3], 0
    %8 = vsyncpa [#allocation6], 0
    %9 = vsyncpa [#allocation4], 0
    // Predicated region
    $region2: #{tpu_custom_call.1} parent=1 // pred_check
      _
    $region3: #{tpu_custom_call.1} parent=1 // pred_check_branch
      %11 = sbr.rel (0) target = $region5
    $region4: #{tpu_custom_call.1} parent=1 // pred_region
      %s13 = ssub.s32 128, 128
      %14 = vsyncadd [#allocation3], %s13
      %s16 = sshll.u32 [#allocation2], 4
      %s17 = int_to_ptr.vmem [resolvable:$true] %s16
      %19 = dma.hbm_to_vmem [thread:$0]  %s0, 128, %s17, [#allocation3]
    $region5: #{tpu_custom_call.1} parent=1 // pred_fallthru
      _
    // Predicated region
    $region6: #{tpu_custom_call.1} parent=1 // pred_check
      _
    $region7: #{tpu_custom_call.1} parent=1 // pred_check_branch
      %21 = sbr.rel (0) target = $region9
    $region8: #{tpu_custom_call.1} parent=1 // pred_region
      %s23 = ssub.s32 128, 128
      %24 = vsyncadd [#allocation6], %s23
      %s26 = sshll.u32 [#allocation5], 4
      %s27 = int_to_ptr.vmem [resolvable:$true] %s26
      %29 = dma.hbm_to_vmem [thread:$0]  %s1, 128, %s27, [#allocation6]
    $region9: #{tpu_custom_call.1} parent=1 // pred_fallthru
      _
    // Predicated region
    $region10: #{tpu_custom_call.1} parent=1 // pred_check
      _
    $region11: #{tpu_custom_call.1} parent=1 // pred_check_branch
      %31 = sbr.rel (0) target = $region13
    $region12: #{tpu_custom_call.1} parent=1 // pred_region
      %32 = dma.done [#allocation3], 128
    $region13: #{tpu_custom_call.1} parent=1 // pred_fallthru
      _
    // Predicated region
    $region14: #{tpu_custom_call.1} parent=1 // pred_check
      _
    $region15: #{tpu_custom_call.1} parent=1 // pred_check_branch
      %34 = sbr.rel (0) target = $region17
    $region16: #{tpu_custom_call.1} parent=1 // pred_region
      %35 = dma.done [#allocation6], 128
    $region17: #{tpu_custom_call.1} parent=1 // pred_fallthru
      _
    %v36 = vld [vmem:[#allocation5] sm:$0xff]
    %38 = vrot.lane.b32.xlu0 %v36, 32
    %v39 = vpop.permute.xlu0 %38
    %vm41 = vcmask 261120
    %v42 = vsel %vm41, %v36, %v39
    %v43 = vld [vmem:[#allocation2] sm:$0xff]
    %v44 = vadd.f32 %v43, %v42
    %vm45 = vcmask 523264
    %46 = vst.msk [vmem:[#allocation7] sm:$0xff] %vm45, %v44
    // Predicated region
    $region18: #{tpu_custom_call.1} parent=1 // pred_check
      _
    $region19: #{tpu_custom_call.1} parent=1 // pred_check_branch
      %48 = sbr.rel (0) target = $region21
    $region20: #{tpu_custom_call.1} parent=1 // pred_region
      %s50 = ssub.s32 128, 128
      %51 = vsyncadd [#allocation4], %s50
      %s53 = sshll.u32 [#allocation7], 4
      %s54 = int_to_ptr.vmem [resolvable:$true] %s53
      %56 = dma.vmem_to_hbm [thread:$0]  %s54, 128, %s2, [#allocation4]
    $region21: #{tpu_custom_call.1} parent=1 // pred_fallthru
      _
    // Predicated region
    $region22: #{tpu_custom_call.1} parent=1 // pred_check
      _
    $region23: #{tpu_custom_call.1} parent=1 // pred_check_branch
      %58 = sbr.rel (0) target = $region25
    $region24: #{tpu_custom_call.1} parent=1 // pred_region
      %59 = dma.done [#allocation4], 128
    $region25: #{tpu_custom_call.1} parent=1 // pred_fallthru
      _
    %60 = vsyncpa [#allocation3], 1
    %61 = vsyncpa [#allocation6], 1
    %62 = vsyncpa [#allocation4], 1

</llo_original>
